<compile_context>
chip_gen: v7x
topology: tpu7x:2x2x1
jax: 0.10.0
libtpu: 0.0.40
codegen_flags: <defaults>
</compile_context>

<pallas_src>
import functools

import jax
import jax.numpy as jnp
from jax import lax
from jax.experimental import pallas as pl
from jax.experimental.pallas import tpu as pltpu


def _round_up(a, b):
    return (a + b - 1) // b * b


# ---------------------------------------------------------------------------
# Fused kernel: one grid step == B images concatenated along lanes.
# ---------------------------------------------------------------------------
def _resblock_kernel(x_ref, w1_ref, b1_ref, w2_ref, b2_ref, mask_ref, o_ref,
                     *, tap_shifts, compute_dtype):
    """x_ref/o_ref: (1, Cp, B*LF) bf16 zero-padded, row-major-flattened slabs.

    w*_ref: (Cp, 9*Cp) bf16 im2col-packed weights; b*_ref: (Cp, 1) f32;
    mask_ref: (1, B*LF) f32, 1.0 on interior pixels, 0.0 on padding lanes.
    """
    f = x_ref[0].astype(jnp.float32)      # (Cp, B*LF), VMEM-resident
    mask = mask_ref[...]                  # (1, B*LF)

    def taps_of(a):
        # 9 shifted copies stacked along sublanes -> (9*Cp, B*LF).
        # Each piece is Cp = 8 f32 rows (a whole sublane tile) so the concat is
        # tile-aligned; shifts are static lane rotations (XLU), no extra DMA.
        pieces = [a if s == 0 else pltpu.roll(a, shift=s, axis=1)
                  for s in tap_shifts]
        return jnp.concatenate(pieces, axis=0).astype(compute_dtype)
    # TODO(synk): for large Cp or very long lane extents, replace the 9x concat
    # with per-tap matmul accumulation (or write rolled pieces into a VMEM
    # scratch) so the tap temp stops scaling with 9*Cp*lanes.

    # ---- conv1( relu(x) ) + b1, relu  (relu commutes with zero padding) ----
    fr = jnp.maximum(f, 0.0)
    h = jnp.dot(w1_ref[...].astype(compute_dtype), taps_of(fr),
                preferred_element_type=jnp.float32)            # (Cp, B*LF) f32
    h = jnp.maximum(h + b1_ref[...], 0.0) * mask                # re-zero padding

    # ---- conv2(h) + b2 + residual; mask so padding lanes are exact zeros ----
    r = jnp.dot(w2_ref[...].astype(compute_dtype), taps_of(h),
                preferred_element_type=jnp.float32)             # (Cp, B*LF) f32
    o_ref[0] = ((f + r + b2_ref[...]) * mask).astype(o_ref.dtype)


# ---------------------------------------------------------------------------
# Packing helpers (wrapper-side XLA glue).
# ---------------------------------------------------------------------------
def _pick_batch_per_step(N, Cp, LF):
    """Images per grid step: big enough to amortize per-step overhead, small
    enough that the f32 tap temps / bf16 slab blocks stay far under v7x's
    64 MiB VMEM (tap temp <= ~4 MiB, slab block <= ~1 MiB)."""
    max_lanes_taps = (4 * 1024 * 1024) // (9 * Cp * 4)
    max_lanes_slab = (1 * 1024 * 1024) // (Cp * 2)
    max_lanes = max(LF, min(max_lanes_taps, max_lanes_slab))
    return max(1, min(N, max_lanes // LF))


def _pack_input(x, Cp, LF, B, NB):
    """(N, C, H, W) f32 -> (NB//B, Cp, B*LF) bf16: channel pad to Cp, spatial
    zero-pad by 1, flatten rows, 1-lane left guard, lane pad to LF, then
    concatenate B images along lanes."""
    N, C, H, W = x.shape
    xp = jnp.pad(x.astype(jnp.bfloat16),
                 ((0, NB - N), (0, Cp - C), (1, 1), (1, 1)))
    xf = xp.reshape(NB, Cp, (H + 2) * (W + 2))
    xf = jnp.pad(xf, ((0, 0), (0, 0), (1, LF - (H + 2) * (W + 2) - 1)))
    G = NB // B
    return xf.reshape(G, B, Cp, LF).transpose(0, 2, 1, 3).reshape(G, Cp, B * LF)


def _unpack_output(out_wide, N, C, H, W, LF, B):
    """(G, Cp, B*LF) -> (N, C, H, W)."""
    G, Cp, _ = out_wide.shape
    Hp, Wp = H + 2, W + 2
    y = out_wide.reshape(G, Cp, B, LF).transpose(0, 2, 1, 3).reshape(G * B, Cp, LF)
    y = y[:N, :C, 1:1 + Hp * Wp].reshape(N, C, Hp, Wp)
    return y[:, :, 1:H + 1, 1:W + 1]


def _pack_weight(w, Cp):
    """(C_out, C_in, 3, 3) -> (Cp, 9*Cp) bf16; element [co, (ky*3+kx)*Cp + ci]."""
    c_out, c_in = w.shape[0], w.shape[1]
    wt = jnp.transpose(w.astype(jnp.float32), (0, 2, 3, 1))     # (C_out,3,3,C_in)
    wt = jnp.pad(wt, ((0, Cp - c_out), (0, 0), (0, 0), (0, Cp - c_in)))
    return wt.reshape(Cp, 9 * Cp).astype(jnp.bfloat16)


def _pack_bias(b, Cp):
    return jnp.pad(b.astype(jnp.float32), (0, Cp - b.shape[0])).reshape(Cp, 1)


def _interior_mask(H, W, LF, B):
    """(1, B*LF) f32: 1.0 at flat indices that map to interior pixels."""
    Wp = W + 2
    k = jnp.arange(LF)
    y = (k - 1) // Wp
    xc = (k - 1) % Wp
    valid = (k >= 1) & (y >= 1) & (y <= H) & (xc >= 1) & (xc <= W)
    return jnp.tile(valid.astype(jnp.float32).reshape(1, LF), (1, B))


# ---------------------------------------------------------------------------
# Packed-layout entry point (lets chained ResBlocks skip pack/unpack entirely)
# ---------------------------------------------------------------------------
def resblock_forward_packed(f, w1m, b1m, w2m, b2m, mask, *, H, W,
                            compute_dtype=jnp.bfloat16):
    """f: (G, Cp, B*LF) bf16 packed slab (valid zero padding on non-interior
    lanes). Returns a slab of the same shape with the same property, so the
    output feeds the next ResBlock directly — no HBM pack/unpack between
    blocks."""
    G, Cp, lanes = f.shape
    Wp = W + 2

    # tap at spatial offset (dy, dx) == lane rotation by -(dy*Wp + dx)
    tap_shifts = tuple((-(dy * Wp + dx)) % lanes
                       for dy in (-1, 0, 1) for dx in (-1, 0, 1))

    kernel = functools.partial(_resblock_kernel, tap_shifts=tap_shifts,
                               compute_dtype=compute_dtype)

    return pl.pallas_call(
        kernel,
        out_shape=jax.ShapeDtypeStruct((G, Cp, lanes), jnp.bfloat16),
        grid=(G,),
        in_specs=[
            pl.BlockSpec((1, Cp, lanes), lambda g: (g, 0, 0)),   # image slab
            pl.BlockSpec((Cp, 9 * Cp), lambda g: (0, 0)),        # w1 (resident)
            pl.BlockSpec((Cp, 1), lambda g: (0, 0)),             # b1
            pl.BlockSpec((Cp, 9 * Cp), lambda g: (0, 0)),        # w2
            pl.BlockSpec((Cp, 1), lambda g: (0, 0)),             # b2
            pl.BlockSpec((1, lanes), lambda g: (0, 0)),          # interior mask
        ],
        out_specs=pl.BlockSpec((1, Cp, lanes), lambda g: (g, 0, 0)),
        compiler_params=pltpu.CompilerParams(
            # "parallel" only pays on v7x (2 TCs); harmless on v5e/v6e.
            dimension_semantics=("parallel",),
            # above the 16/32 MiB scoped defaults, below v7x's 64 MiB physical;
            # B is chosen so actual per-step live bytes stay far under this.
            vmem_limit_bytes=48 * 1024 * 1024),
    )(f, w1m, b1m, w2m, b2m, mask)
    # TODO(synk): for single very large images, add a second "parallel" grid
    # axis over row bands (1-row / Wp-lane halo) so both v7x TensorCores stay
    # busy at N=1 and per-step blocks shrink further.


# ---------------------------------------------------------------------------
# NCHW wrapper (pack -> fused kernel -> unpack)
# ---------------------------------------------------------------------------
@functools.partial(jax.jit, static_argnames=("compute_dtype",))
def resblock_forward(x_nchw, w1, b1, w2, b2, compute_dtype=jnp.bfloat16):
    N, C, H, W = x_nchw.shape
    Hp, Wp = H + 2, W + 2
    Cp = _round_up(C, 8)
    LF = _round_up(Hp * Wp + 2, 128)       # per-image lane extent (guarded)
    B = _pick_batch_per_step(N, Cp, LF)    # images per grid step
    G = -(-N // B)
    NB = G * B

    f = _pack_input(x_nchw, Cp, LF, B, NB)                     # (G, Cp, B*LF) bf16
    w1m = _pack_weight(w1, Cp)                                  # (Cp, 9*Cp) bf16
    w2m = _pack_weight(w2, Cp)
    b1m = _pack_bias(b1, Cp)                                    # (Cp, 1) f32
    b2m = _pack_bias(b2, Cp)
    mask = _interior_mask(H, W, LF, B)                          # (1, B*LF) f32

    out_wide = resblock_forward_packed(f, w1m, b1m, w2m, b2m, mask,
                                       H=H, W=W, compute_dtype=compute_dtype)

    out = _unpack_output(out_wide, N, C, H, W, LF, B)
    return out.astype(x_nchw.dtype)


# ---------------------------------------------------------------------------
# Pure-JAX reference (NCHW, mirrors the PyTorch module)
# ---------------------------------------------------------------------------
def resblock_reference(x, w1, b1, w2, b2):
    def conv(a, w, b):
        y = lax.conv_general_dilated(
            a, w, window_strides=(1, 1), padding=((1, 1), (1, 1)),
            dimension_numbers=("NCHW", "OIHW", "NCHW"))
        return y + b[None, :, None, None]

    h = jnp.maximum(conv(jnp.maximum(x, 0.0), w1, b1), 0.0)
    return x + conv(h, w2, b2)


# ---------------------------------------------------------------------------
if __name__ == "__main__":
    N, C, H, W = 2, 4, 16, 16   # indim == outdim == 4, stride == 1 -> no downsample

    key = jax.random.PRNGKey(0)
    kx, k1, k2, kb1, kb2 = jax.random.split(key, 5)

    x = jax.random.normal(kx, (N, C, H, W), dtype=jnp.float32)

    # kaiming_normal_(mode='fan_out', nonlinearity='relu'): std = sqrt(2/(C_out*9))
    std = (2.0 / (C * 9)) ** 0.5
    w1 = jax.random.normal(k1, (C, C, 3, 3), dtype=jnp.float32) * std
    w2 = jax.random.normal(k2, (C, C, 3, 3), dtype=jnp.float32) * std
    # module initializes biases to 0; use small values here to exercise the path
    b1 = 0.1 * jax.random.normal(kb1, (C,), dtype=jnp.float32)
    b2 = 0.1 * jax.random.normal(kb2, (C,), dtype=jnp.float32)

    out = jax.block_until_ready(resblock_forward(x, w1, b1, w2, b2))
    ref = resblock_reference(x, w1, b1, w2, b2)

    assert out.shape == (N, C, H, W)
    assert out.dtype == x.dtype
    # bf16 HBM storage + bf16 MXU inputs (f32 accumulation) -> loosened tolerance.
    max_err = float(jnp.max(jnp.abs(out - ref)))
    assert jnp.allclose(out, ref, rtol=5e-2, atol=5e-2), \
        f"mismatch vs reference (max abs err {max_err})"
    print("KERNEL_OK")
</pallas_src>

<mosaic_0001>
module attributes {stable_mosaic.version = 11 : i64} {
  func.func @_resblock_kernel(%arg0: i32, %arg1: memref<1x8x768xbf16, #tpu.memory_space<vmem>>, %arg2: memref<8x72xbf16, #tpu.memory_space<vmem>>, %arg3: memref<8x1xf32, #tpu.memory_space<vmem>>, %arg4: memref<8x72xbf16, #tpu.memory_space<vmem>>, %arg5: memref<8x1xf32, #tpu.memory_space<vmem>>, %arg6: memref<1x768xf32, #tpu.memory_space<vmem>>, %arg7: memref<1x8x768xbf16, #tpu.memory_space<vmem>>) attributes {dimension_semantics = [#tpu.dimension_semantics<parallel>], iteration_bounds = array<i64: 1>, scalar_prefetch = 0 : i64, scratch_operands = 0 : i64, tpu.core_type = #tpu.core_type<tc>, window_params = [{transform_indices = @transform_0, window_bounds = array<i64: 1, 8, 768>}, {pipeline_mode = #tpu.pipeline_mode<synchronous>, transform_indices = @transform_1, window_bounds = array<i64: 8, 72>}, {pipeline_mode = #tpu.pipeline_mode<synchronous>, transform_indices = @transform_2, window_bounds = array<i64: 8, 1>}, {pipeline_mode = #tpu.pipeline_mode<synchronous>, transform_indices = @transform_3, window_bounds = array<i64: 8, 72>}, {pipeline_mode = #tpu.pipeline_mode<synchronous>, transform_indices = @transform_4, window_bounds = array<i64: 8, 1>}, {pipeline_mode = #tpu.pipeline_mode<synchronous>, transform_indices = @transform_5, window_bounds = array<i64: 1, 768>}, {transform_indices = @transform_6, window_bounds = array<i64: 1, 8, 768>}]} {
    %c0 = arith.constant 0 : index
    %c0_0 = arith.constant 0 : index
    %c0_1 = arith.constant 0 : index
    %0 = vector.load %arg1[%c0, %c0_0, %c0_1] : memref<1x8x768xbf16, #tpu.memory_space<vmem>>, vector<1x8x768xbf16>
    %1 = vector.shape_cast %0 : vector<1x8x768xbf16> to vector<8x768xbf16>
    %2 = arith.extf %1 : vector<8x768xbf16> to vector<8x768xf32>
    %c0_2 = arith.constant 0 : index
    %c0_3 = arith.constant 0 : index
    %3 = vector.load %arg6[%c0_2, %c0_3] : memref<1x768xf32, #tpu.memory_space<vmem>>, vector<1x768xf32>
    %cst = arith.constant 0.000000e+00 : f32
    %4 = vector.broadcast %cst : f32 to vector<8x768xf32>
    %5 = arith.maximumf %2, %4 : vector<8x768xf32>
    %c0_4 = arith.constant 0 : index
    %c0_5 = arith.constant 0 : index
    %6 = vector.load %arg2[%c0_4, %c0_5] : memref<8x72xbf16, #tpu.memory_space<vmem>>, vector<8x72xbf16>
    %c19_i32 = arith.constant 19 : i32
    %7 = tpu.dynamic_rotate %5 by %c19_i32 dim 1 : vector<8x768xf32>, i32 -> vector<8x768xf32>
    %c18_i32 = arith.constant 18 : i32
    %8 = tpu.dynamic_rotate %5 by %c18_i32 dim 1 : vector<8x768xf32>, i32 -> vector<8x768xf32>
    %c17_i32 = arith.constant 17 : i32
    %9 = tpu.dynamic_rotate %5 by %c17_i32 dim 1 : vector<8x768xf32>, i32 -> vector<8x768xf32>
    %c1_i32 = arith.constant 1 : i32
    %10 = tpu.dynamic_rotate %5 by %c1_i32 dim 1 : vector<8x768xf32>, i32 -> vector<8x768xf32>
    %c767_i32 = arith.constant 767 : i32
    %11 = tpu.dynamic_rotate %5 by %c767_i32 dim 1 : vector<8x768xf32>, i32 -> vector<8x768xf32>
    %c751_i32 = arith.constant 751 : i32
    %12 = tpu.dynamic_rotate %5 by %c751_i32 dim 1 : vector<8x768xf32>, i32 -> vector<8x768xf32>
    %c750_i32 = arith.constant 750 : i32
    %13 = tpu.dynamic_rotate %5 by %c750_i32 dim 1 : vector<8x768xf32>, i32 -> vector<8x768xf32>
    %c749_i32 = arith.constant 749 : i32
    %14 = tpu.dynamic_rotate %5 by %c749_i32 dim 1 : vector<8x768xf32>, i32 -> vector<8x768xf32>
    %15 = tpu.concatenate %7, %8, %9, %10, %5, %11, %12, %13, %14 in 0 : vector<8x768xf32>, vector<8x768xf32>, vector<8x768xf32>, vector<8x768xf32>, vector<8x768xf32>, vector<8x768xf32>, vector<8x768xf32>, vector<8x768xf32>, vector<8x768xf32> -> vector<72x768xf32>
    %16 = arith.truncf %15 : vector<72x768xf32> to vector<72x768xbf16>
    %cst_6 = arith.constant dense<0.000000e+00> : vector<8x768xf32>
    %17 = tpu.matmul %6, %16, %cst_6 {dimension_numbers = #tpu.dot_dimension_numbers<[1], [0], [0], [1], [0, 0, 1, 1], [], []>} : vector<8x72xbf16>, vector<72x768xbf16>, vector<8x768xf32> -> vector<8x768xf32>
    %c0_7 = arith.constant 0 : index
    %c0_8 = arith.constant 0 : index
    %18 = vector.load %arg3[%c0_7, %c0_8] : memref<8x1xf32, #tpu.memory_space<vmem>>, vector<8x1xf32>
    %19 = vector.broadcast %18 : vector<8x1xf32> to vector<8x768xf32>
    %20 = arith.addf %17, %19 : vector<8x768xf32>
    %cst_9 = arith.constant 0.000000e+00 : f32
    %21 = vector.broadcast %cst_9 : f32 to vector<8x768xf32>
    %22 = arith.maximumf %20, %21 : vector<8x768xf32>
    %23 = vector.broadcast %3 : vector<1x768xf32> to vector<8x768xf32>
    %24 = arith.mulf %22, %23 : vector<8x768xf32>
    %c0_10 = arith.constant 0 : index
    %c0_11 = arith.constant 0 : index
    %25 = vector.load %arg4[%c0_10, %c0_11] : memref<8x72xbf16, #tpu.memory_space<vmem>>, vector<8x72xbf16>
    %c19_i32_12 = arith.constant 19 : i32
    %26 = tpu.dynamic_rotate %24 by %c19_i32_12 dim 1 : vector<8x768xf32>, i32 -> vector<8x768xf32>
    %c18_i32_13 = arith.constant 18 : i32
    %27 = tpu.dynamic_rotate %24 by %c18_i32_13 dim 1 : vector<8x768xf32>, i32 -> vector<8x768xf32>
    %c17_i32_14 = arith.constant 17 : i32
    %28 = tpu.dynamic_rotate %24 by %c17_i32_14 dim 1 : vector<8x768xf32>, i32 -> vector<8x768xf32>
    %c1_i32_15 = arith.constant 1 : i32
    %29 = tpu.dynamic_rotate %24 by %c1_i32_15 dim 1 : vector<8x768xf32>, i32 -> vector<8x768xf32>
    %c767_i32_16 = arith.constant 767 : i32
    %30 = tpu.dynamic_rotate %24 by %c767_i32_16 dim 1 : vector<8x768xf32>, i32 -> vector<8x768xf32>
    %c751_i32_17 = arith.constant 751 : i32
    %31 = tpu.dynamic_rotate %24 by %c751_i32_17 dim 1 : vector<8x768xf32>, i32 -> vector<8x768xf32>
    %c750_i32_18 = arith.constant 750 : i32
    %32 = tpu.dynamic_rotate %24 by %c750_i32_18 dim 1 : vector<8x768xf32>, i32 -> vector<8x768xf32>
    %c749_i32_19 = arith.constant 749 : i32
    %33 = tpu.dynamic_rotate %24 by %c749_i32_19 dim 1 : vector<8x768xf32>, i32 -> vector<8x768xf32>
    %34 = tpu.concatenate %26, %27, %28, %29, %24, %30, %31, %32, %33 in 0 : vector<8x768xf32>, vector<8x768xf32>, vector<8x768xf32>, vector<8x768xf32>, vector<8x768xf32>, vector<8x768xf32>, vector<8x768xf32>, vector<8x768xf32>, vector<8x768xf32> -> vector<72x768xf32>
    %35 = arith.truncf %34 : vector<72x768xf32> to vector<72x768xbf16>
    %cst_20 = arith.constant dense<0.000000e+00> : vector<8x768xf32>
    %36 = tpu.matmul %25, %35, %cst_20 {dimension_numbers = #tpu.dot_dimension_numbers<[1], [0], [0], [1], [0, 0, 1, 1], [], []>} : vector<8x72xbf16>, vector<72x768xbf16>, vector<8x768xf32> -> vector<8x768xf32>
    %37 = arith.addf %2, %36 : vector<8x768xf32>
    %c0_21 = arith.constant 0 : index
    %c0_22 = arith.constant 0 : index
    %38 = vector.load %arg5[%c0_21, %c0_22] : memref<8x1xf32, #tpu.memory_space<vmem>>, vector<8x1xf32>
    %39 = vector.broadcast %38 : vector<8x1xf32> to vector<8x768xf32>
    %40 = arith.addf %37, %39 : vector<8x768xf32>
    %41 = vector.broadcast %3 : vector<1x768xf32> to vector<8x768xf32>
    %42 = arith.mulf %40, %41 : vector<8x768xf32>
    %43 = arith.truncf %42 : vector<8x768xf32> to vector<8x768xbf16>
    %c0_23 = arith.constant 0 : index
    %c0_24 = arith.constant 0 : index
    %c0_25 = arith.constant 0 : index
    %44 = vector.load %arg7[%c0_23, %c0_24, %c0_25] : memref<1x8x768xbf16, #tpu.memory_space<vmem>>, vector<1x8x768xbf16>
    %45 = vector.shape_cast %44 : vector<1x8x768xbf16> to vector<8x768xbf16>
    %46 = vector.shape_cast %43 : vector<8x768xbf16> to vector<1x8x768xbf16>
    tpu.vector_store %arg7[%c0_23, %c0_24, %c0_25], %46 {strides = array<i32>} : memref<1x8x768xbf16, #tpu.memory_space<vmem>>, vector<1x8x768xbf16>,
    return
  }
  func.func @transform_0(%arg0: i32) -> (i32, i32, i32) {
    %c0_i32 = arith.constant 0 : i32
    %c0_i32_0 = arith.constant 0 : i32
    %c0_i32_1 = arith.constant 0 : i32
    return %arg0, %c0_i32, %c0_i32_0 : i32, i32, i32
  }
  func.func @transform_1(%arg0: i32) -> (i32, i32) {
    %c0_i32 = arith.constant 0 : i32
    %c0_i32_0 = arith.constant 0 : i32
    %c0_i32_1 = arith.constant 0 : i32
    return %c0_i32, %c0_i32_0 : i32, i32
  }
  func.func @transform_2(%arg0: i32) -> (i32, i32) {
    %c0_i32 = arith.constant 0 : i32
    %c0_i32_0 = arith.constant 0 : i32
    %c0_i32_1 = arith.constant 0 : i32
    return %c0_i32, %c0_i32_0 : i32, i32
  }
  func.func @transform_3(%arg0: i32) -> (i32, i32) {
    %c0_i32 = arith.constant 0 : i32
    %c0_i32_0 = arith.constant 0 : i32
    %c0_i32_1 = arith.constant 0 : i32
    return %c0_i32, %c0_i32_0 : i32, i32
  }
  func.func @transform_4(%arg0: i32) -> (i32, i32) {
    %c0_i32 = arith.constant 0 : i32
    %c0_i32_0 = arith.constant 0 : i32
    %c0_i32_1 = arith.constant 0 : i32
    return %c0_i32, %c0_i32_0 : i32, i32
  }
  func.func @transform_5(%arg0: i32) -> (i32, i32) {
    %c0_i32 = arith.constant 0 : i32
    %c0_i32_0 = arith.constant 0 : i32
    %c0_i32_1 = arith.constant 0 : i32
    return %c0_i32, %c0_i32_0 : i32, i32
  }
  func.func @transform_6(%arg0: i32) -> (i32, i32, i32) {
    %c0_i32 = arith.constant 0 : i32
    %c0_i32_0 = arith.constant 0 : i32
    %c0_i32_1 = arith.constant 0 : i32
    return %arg0, %c0_i32, %c0_i32_0 : i32, i32, i32
  }
}

</mosaic_0001>

<llo_original>
// kernel: resblock_forward.1
$region0: #{resblock_forward.1}
  #allocation0 [shape = 'u32[]', space=smem, size = 0x4, offset = 0x4, fixed_abs, tag = 'smem constant byte address 0x4 - core index']
  #allocation1 [shape = 'u32[144,128]{1,0:T(1,128)}', space=vmem, size = 0x12000, scoped, tag = 'internal scratch']
  %s0 = inlined_call_operand.vmem [shape: bf16[1,8,768], index: 0, kind: input, shape index: {}]
  %s1 = inlined_call_operand.vmem [shape: bf16[8,72], index: 1, kind: input, shape index: {}]
  %s2 = inlined_call_operand.vmem [shape: f32[8,1], index: 2, kind: input, shape index: {}]
  %s3 = inlined_call_operand.vmem [shape: bf16[8,72], index: 3, kind: input, shape index: {}]
  %s4 = inlined_call_operand.vmem [shape: f32[8,1], index: 4, kind: input, shape index: {}]
  %s5 = inlined_call_operand.vmem [shape: f32[1,768], index: 5, kind: input, shape index: {}]
  %s6 = inlined_call_operand.vmem [shape: bf16[1,8,768], index: 6, kind: output, shape index: {}]
  %s7 = sld [smem:[#allocation0]]
  $region34: #{resblock_forward.1} parent=0
    _
  %s9 = ssub.s32 1, %s7
  %s10 = scalar_select 0, %s9, %s7
  // Predicated region
  $region2: #{resblock_forward.1} parent=0 // pred_check
    _
  $region3: #{resblock_forward.1} parent=0 // pred_check_branch
    %12 = sbr.rel (0) target = $region5
  $region4: #{resblock_forward.1} parent=0 // pred_region
    _
  $region5: #{resblock_forward.1} parent=0 // pred_fallthru
    _
  // Predicated region
  $region6: #{resblock_forward.1} parent=0 // pred_check
    _
  $region7: #{resblock_forward.1} parent=0 // pred_check_branch
    %14 = sbr.rel (0) target = $region9
  $region8: #{resblock_forward.1} parent=0 // pred_region
    _
  $region9: #{resblock_forward.1} parent=0 // pred_fallthru
    _
  // Predicated region
  $region10: #{resblock_forward.1} parent=0 // pred_check
    _
  $region11: #{resblock_forward.1} parent=0 // pred_check_branch
    %16 = sbr.rel (0) target = $region13
  $region12: #{resblock_forward.1} parent=0 // pred_region
    _
  $region13: #{resblock_forward.1} parent=0 // pred_fallthru
    _
  // Predicated region
  $region14: #{resblock_forward.1} parent=0 // pred_check
    _
  $region15: #{resblock_forward.1} parent=0 // pred_check_branch
    %18 = sbr.rel (0) target = $region17
  $region16: #{resblock_forward.1} parent=0 // pred_region
    _
  $region17: #{resblock_forward.1} parent=0 // pred_fallthru
    _
  // Predicated region
  $region18: #{resblock_forward.1} parent=0 // pred_check
    _
  $region19: #{resblock_forward.1} parent=0 // pred_check_branch
    %20 = sbr.rel (0) target = $region21
  $region20: #{resblock_forward.1} parent=0 // pred_region
    _
  $region21: #{resblock_forward.1} parent=0 // pred_fallthru
    _
  // Predicated region
  $region22: #{resblock_forward.1} parent=0 // pred_check
    _
  $region23: #{resblock_forward.1} parent=0 // pred_check_branch
    %22 = sbr.rel (0) target = $region25
  $region24: #{resblock_forward.1} parent=0 // pred_region
    _
  $region25: #{resblock_forward.1} parent=0 // pred_fallthru
    _
  %v24 = vld [vmem:[%s0] sm:$0xff]
  %v25 = vld [vmem:[%s0 + $0x8] sm:$0xff]
  %v26 = vld [vmem:[%s0 + $0x10] sm:$0xff]
  %v27 = vunpack.c.l.bf16 %v24
  %v28 = vunpack.c.h.bf16 %v24
  %v29 = vunpack.c.l.bf16 %v25
  %v30 = vunpack.c.h.bf16 %v25
  %v31 = vunpack.c.l.bf16 %v26
  %v32 = vunpack.c.h.bf16 %v26
  %v33 = vld [vmem:[%s5] sm:$0x3f]
  %v34 = vmax.f32 %v27, 0.0
  %v35 = vmax.f32 %v28, 0.0
  %v36 = vmax.f32 %v29, 0.0
  %v37 = vmax.f32 %v30, 0.0
  %v38 = vmax.f32 %v31, 0.0
  %v39 = vmax.f32 %v32, 0.0
  %v40 = vld [vmem:[%s1] sm:$0xf]
  %41 = vrot.lane.b32.xlu0 %v34, 19
  %v42 = vpop.permute.xlu0 %41
  %43 = vrot.lane.b32.xlu0 %v35, 19
  %v44 = vpop.permute.xlu0 %43
  %45 = vrot.lane.b32.xlu0 %v36, 19
  %v46 = vpop.permute.xlu0 %45
  %47 = vrot.lane.b32.xlu0 %v37, 19
  %v48 = vpop.permute.xlu0 %47
  %49 = vrot.lane.b32.xlu0 %v38, 19
  %v50 = vpop.permute.xlu0 %49
  %51 = vrot.lane.b32.xlu0 %v39, 19
  %v52 = vpop.permute.xlu0 %51
  %v53 = vlaneseq
  %v54 = vand.u32 %v53, 127
  %vm55 = vcmp.lt.s32.totalorder %v54, 19
  %v56 = vsel %vm55, %v50, %v52
  %v57 = vsel %vm55, %v48, %v50
  %v58 = vsel %vm55, %v46, %v48
  %v59 = vsel %vm55, %v44, %v46
  %v60 = vsel %vm55, %v42, %v44
  %v61 = vsel %vm55, %v52, %v42
  %62 = vrot.lane.b32.xlu0 %v34, 18
  %v63 = vpop.permute.xlu0 %62
  %64 = vrot.lane.b32.xlu0 %v35, 18
  %v65 = vpop.permute.xlu0 %64
  %66 = vrot.lane.b32.xlu0 %v36, 18
  %v67 = vpop.permute.xlu0 %66
  %68 = vrot.lane.b32.xlu0 %v37, 18
  %v69 = vpop.permute.xlu0 %68
  %70 = vrot.lane.b32.xlu0 %v38, 18
  %v71 = vpop.permute.xlu0 %70
  %72 = vrot.lane.b32.xlu0 %v39, 18
  %v73 = vpop.permute.xlu0 %72
  %vm74 = vcmp.lt.s32.totalorder %v54, 18
  %v75 = vsel %vm74, %v71, %v73
  %v76 = vsel %vm74, %v69, %v71
  %v77 = vsel %vm74, %v67, %v69
  %v78 = vsel %vm74, %v65, %v67
  %v79 = vsel %vm74, %v63, %v65
  %v80 = vsel %vm74, %v73, %v63
  %81 = vrot.lane.b32.xlu0 %v34, 17
  %v82 = vpop.permute.xlu0 %81
  %83 = vrot.lane.b32.xlu0 %v35, 17
  %v84 = vpop.permute.xlu0 %83
  %85 = vrot.lane.b32.xlu0 %v36, 17
  %v86 = vpop.permute.xlu0 %85
  %87 = vrot.lane.b32.xlu0 %v37, 17
  %v88 = vpop.permute.xlu0 %87
  %89 = vrot.lane.b32.xlu0 %v38, 17
  %v90 = vpop.permute.xlu0 %89
  %91 = vrot.lane.b32.xlu0 %v39, 17
  %v92 = vpop.permute.xlu0 %91
  %vm93 = vcmp.lt.s32.totalorder %v54, 17
  %v94 = vsel %vm93, %v90, %v92
  %v95 = vsel %vm93, %v88, %v90
  %v96 = vsel %vm93, %v86, %v88
  %v97 = vsel %vm93, %v84, %v86
  %v98 = vsel %vm93, %v82, %v84
  %v99 = vsel %vm93, %v92, %v82
  %100 = vrot.lane.b32.xlu0 %v34, 1
  %v101 = vpop.permute.xlu0 %100
  %102 = vrot.lane.b32.xlu0 %v35, 1
  %v103 = vpop.permute.xlu0 %102
  %104 = vrot.lane.b32.xlu0 %v36, 1
  %v105 = vpop.permute.xlu0 %104
  %106 = vrot.lane.b32.xlu0 %v37, 1
  %v107 = vpop.permute.xlu0 %106
  %108 = vrot.lane.b32.xlu0 %v38, 1
  %v109 = vpop.permute.xlu0 %108
  %110 = vrot.lane.b32.xlu0 %v39, 1
  %v111 = vpop.permute.xlu0 %110
  %vm112 = vcmp.lt.s32.totalorder %v54, 1
  %v113 = vsel %vm112, %v109, %v111
  %v114 = vsel %vm112, %v107, %v109
  %v115 = vsel %vm112, %v105, %v107
  %v116 = vsel %vm112, %v103, %v105
  %v117 = vsel %vm112, %v101, %v103
  %v118 = vsel %vm112, %v111, %v101
  %119 = vrot.lane.b32.xlu0 %v34, 127
  %v120 = vpop.permute.xlu0 %119
  %121 = vrot.lane.b32.xlu0 %v35, 127
  %v122 = vpop.permute.xlu0 %121
  %123 = vrot.lane.b32.xlu0 %v36, 127
  %v124 = vpop.permute.xlu0 %123
  %125 = vrot.lane.b32.xlu0 %v37, 127
  %v126 = vpop.permute.xlu0 %125
  %127 = vrot.lane.b32.xlu0 %v38, 127
  %v128 = vpop.permute.xlu0 %127
  %129 = vrot.lane.b32.xlu0 %v39, 127
  %v130 = vpop.permute.xlu0 %129
  %vm131 = vcmp.lt.s32.totalorder %v54, 127
  %v132 = vsel %vm131, %v128, %v130
  %v133 = vsel %vm131, %v126, %v128
  %v134 = vsel %vm131, %v124, %v126
  %v135 = vsel %vm131, %v122, %v124
  %v136 = vsel %vm131, %v120, %v122
  %v137 = vsel %vm131, %v130, %v120
  %138 = vrot.lane.b32.xlu0 %v34, 111
  %v139 = vpop.permute.xlu0 %138
  %140 = vrot.lane.b32.xlu0 %v35, 111
  %v141 = vpop.permute.xlu0 %140
  %142 = vrot.lane.b32.xlu0 %v36, 111
  %v143 = vpop.permute.xlu0 %142
  %144 = vrot.lane.b32.xlu0 %v37, 111
  %v145 = vpop.permute.xlu0 %144
  %146 = vrot.lane.b32.xlu0 %v38, 111
  %v147 = vpop.permute.xlu0 %146
  %148 = vrot.lane.b32.xlu0 %v39, 111
  %v149 = vpop.permute.xlu0 %148
  %vm150 = vcmp.lt.s32.totalorder %v54, 111
  %v151 = vsel %vm150, %v147, %v149
  %v152 = vsel %vm150, %v145, %v147
  %v153 = vsel %vm150, %v143, %v145
  %v154 = vsel %vm150, %v141, %v143
  %v155 = vsel %vm150, %v139, %v141
  %v156 = vsel %vm150, %v149, %v139
  %157 = vrot.lane.b32.xlu0 %v34, 110
  %v158 = vpop.permute.xlu0 %157
  %159 = vrot.lane.b32.xlu0 %v35, 110
  %v160 = vpop.permute.xlu0 %159
  %161 = vrot.lane.b32.xlu0 %v36, 110
  %v162 = vpop.permute.xlu0 %161
  %163 = vrot.lane.b32.xlu0 %v37, 110
  %v164 = vpop.permute.xlu0 %163
  %165 = vrot.lane.b32.xlu0 %v38, 110
  %v166 = vpop.permute.xlu0 %165
  %167 = vrot.lane.b32.xlu0 %v39, 110
  %v168 = vpop.permute.xlu0 %167
  %vm169 = vcmp.lt.s32.totalorder %v54, 110
  %v170 = vsel %vm169, %v166, %v168
  %v171 = vsel %vm169, %v164, %v166
  %v172 = vsel %vm169, %v162, %v164
  %v173 = vsel %vm169, %v160, %v162
  %v174 = vsel %vm169, %v158, %v160
  %v175 = vsel %vm169, %v168, %v158
  %176 = vrot.lane.b32.xlu0 %v34, 109
  %v177 = vpop.permute.xlu0 %176
  %178 = vrot.lane.b32.xlu0 %v35, 109
  %v179 = vpop.permute.xlu0 %178
  %180 = vrot.lane.b32.xlu0 %v36, 109
  %v181 = vpop.permute.xlu0 %180
  %182 = vrot.lane.b32.xlu0 %v37, 109
  %v183 = vpop.permute.xlu0 %182
  %184 = vrot.lane.b32.xlu0 %v38, 109
  %v185 = vpop.permute.xlu0 %184
  %186 = vrot.lane.b32.xlu0 %v39, 109
  %v187 = vpop.permute.xlu0 %186
  %vm188 = vcmp.lt.s32.totalorder %v54, 109
  %v189 = vsel %vm188, %v185, %v187
  %v190 = vsel %vm188, %v183, %v185
  %v191 = vsel %vm188, %v181, %v183
  %v192 = vsel %vm188, %v179, %v181
  %v193 = vsel %vm188, %v177, %v179
  %v194 = vsel %vm188, %v187, %v177
  %v195 = vpack.c.bf16 %v80, %v61
  %v196 = vpack.c.bf16 %v79, %v60
  %v197 = vpack.c.bf16 %v78, %v59
  %v198 = vpack.c.bf16 %v77, %v58
  %v199 = vpack.c.bf16 %v76, %v57
  %v200 = vpack.c.bf16 %v75, %v56
  %v201 = vpack.c.bf16 %v118, %v99
  %v202 = vpack.c.bf16 %v117, %v98
  %v203 = vpack.c.bf16 %v116, %v97
  %v204 = vpack.c.bf16 %v115, %v96
  %v205 = vpack.c.bf16 %v114, %v95
  %v206 = vpack.c.bf16 %v113, %v94
  %v207 = vpack.c.bf16 %v136, %v34
  %v208 = vpack.c.bf16 %v135, %v35
  %v209 = vpack.c.bf16 %v134, %v36
  %v210 = vpack.c.bf16 %v133, %v37
  %v211 = vpack.c.bf16 %v132, %v38
  %v212 = vpack.c.bf16 %v137, %v39
  %v213 = vpack.c.bf16 %v174, %v155
  %v214 = vpack.c.bf16 %v173, %v154
  %v215 = vpack.c.bf16 %v172, %v153
  %v216 = vpack.c.bf16 %v171, %v152
  %v217 = vpack.c.bf16 %v170, %v151
  %v218 = vpack.c.bf16 %v175, %v156
  %v219 = vpack.c.bf16 %v193, %v193
  %v220 = vpack.c.bf16 %v192, %v192
  %v221 = vpack.c.bf16 %v191, %v191
  %v222 = vpack.c.bf16 %v190, %v190
  %v223 = vpack.c.bf16 %v189, %v189
  %v224 = vpack.c.bf16 %v194, %v194
  %v225 = vld [vmem:[%s2] sm:$0xff]
  %227 = vset.pattern.permute.xlu0 0
  %228 = vperm.xlu0 %227, %v225
  %v229 = vpop.permute.xlu0 %228
  %vm231 = vcmask 588800
  %v233 = vsel %vm231, %v40, 0
  %vm235 = vcmask 1043456
  %v237 = vsel %vm235, %v219, 0
  %v240 = vsel %vm235, %v220, 0
  %v243 = vsel %vm235, %v221, 0
  %v246 = vsel %vm235, %v222, 0
  %v249 = vsel %vm235, %v223, 0
  %v252 = vsel %vm235, %v224, 0
  %254 = vmatprep.subr.bf16.mxu0 %v196
  %255 = vmatpush1.bf16.msra.mxu0 %v195
  %256 = vmatprep.subr.bf16.mxu0 %v202
  %257 = vmatpush1.bf16.msra.mxu0 %v201
  %258 = vmatprep.subr.bf16.mxu0 %v208
  %259 = vmatpush1.bf16.msra.mxu0 %v207
  %260 = vmatprep.subr.bf16.mxu0 %v214
  %261 = vmatpush1.bf16.msra.mxu0 %v213
  %262 = vmatprep.subr.bf16.mxu0 %v240
  %263 = vmatpush1.bf16.msra.mxu0 %v237
  %264 = vmatprep.subr.bf16.mxu0 0
  %265 = vmatpush1.bf16.msra.mxu0 0
  %266 = vmatprep.subr.bf16.mxu0 0
  %267 = vmatpush1.bf16.msra.mxu0 0
  %268 = vmatprep.subr.bf16.mxu0 0
  %269 = vmatpush1.bf16.msra.mxu0 0
  %270 = vmatprep.subr.bf16.mxu0 0
  %271 = vmatpush1.bf16.msra.mxu0 0
  %272 = vmatprep.subr.bf16.mxu0 0
  %273 = vmatpush1.bf16.msra.mxu0 0
  %274 = vmatprep.subr.bf16.mxu0 0
  %275 = vmatpush1.bf16.msra.mxu0 0
  %276 = vmatprep.subr.bf16.mxu0 0
  %277 = vmatpush1.bf16.msra.mxu0 0
  %278 = vmatprep.subr.bf16.mxu0 0
  %279 = vmatpush1.bf16.msra.mxu0 0
  %280 = vmatprep.subr.bf16.mxu0 0
  %281 = vmatpush1.bf16.msra.mxu0 0
  %282 = vmatprep.subr.bf16.mxu0 0
  %283 = vmatpush1.bf16.msra.mxu0 0
  %284 = vmatprep.subr.bf16.mxu0 0
  %285 = vmatpush1.bf16.msra.mxu0 0
  %286 = vmatprep.mubr.bf16.mxu0 0
  %287 = vmatmul.mubr.bf16.gmra.mrb[0].mxu0 %v233
  %v288 = vpop.f32.mrb[0].mxu0
  %v289 = vadd.f32 %v229, %v288
  %v290 = vpop.f32.mrb[0].mxu0
  %v291 = vadd.f32 %v229, %v290
  %v292 = vpop.f32.mrb[0].mxu0
  %v293 = vpop.f32.mrb[0].mxu0
  %294 = vdwg.mxu0
  %295 = vmatprep.subr.bf16.mxu0 %v198
  %296 = vmatpush1.bf16.msra.mxu0 %v197
  %297 = vmatprep.subr.bf16.mxu0 %v204
  %298 = vmatpush1.bf16.msra.mxu0 %v203
  %299 = vmatprep.subr.bf16.mxu0 %v210
  %300 = vmatpush1.bf16.msra.mxu0 %v209
  %301 = vmatprep.subr.bf16.mxu0 %v216
  %302 = vmatpush1.bf16.msra.mxu0 %v215
  %303 = vmatprep.subr.bf16.mxu0 %v246
  %304 = vmatpush1.bf16.msra.mxu0 %v243
  %305 = vmatprep.subr.bf16.mxu0 0
  %306 = vmatpush1.bf16.msra.mxu0 0
  %307 = vmatprep.subr.bf16.mxu0 0
  %308 = vmatpush1.bf16.msra.mxu0 0
  %309 = vmatprep.subr.bf16.mxu0 0
  %310 = vmatpush1.bf16.msra.mxu0 0
  %311 = vmatprep.subr.bf16.mxu0 0
  %312 = vmatpush1.bf16.msra.mxu0 0
  %313 = vmatprep.subr.bf16.mxu0 0
  %314 = vmatpush1.bf16.msra.mxu0 0
  %315 = vmatprep.subr.bf16.mxu0 0
  %316 = vmatpush1.bf16.msra.mxu0 0
  %317 = vmatprep.subr.bf16.mxu0 0
  %318 = vmatpush1.bf16.msra.mxu0 0
  %319 = vmatprep.subr.bf16.mxu0 0
  %320 = vmatpush1.bf16.msra.mxu0 0
  %321 = vmatprep.subr.bf16.mxu0 0
  %322 = vmatpush1.bf16.msra.mxu0 0
  %323 = vmatprep.subr.bf16.mxu0 0
  %324 = vmatpush1.bf16.msra.mxu0 0
  %325 = vmatprep.subr.bf16.mxu0 0
  %326 = vmatpush1.bf16.msra.mxu0 0
  %327 = vmatprep.mubr.bf16.mxu0 0
  %328 = vmatmul.mubr.bf16.gmra.mrb[0].mxu0 %v233
  %v329 = vpop.f32.mrb[0].mxu0
  %v330 = vadd.f32 %v229, %v329
  %v331 = vpop.f32.mrb[0].mxu0
  %v332 = vadd.f32 %v229, %v331
  %v333 = vpop.f32.mrb[0].mxu0
  %v334 = vpop.f32.mrb[0].mxu0
  %335 = vdwg.mxu0
  %336 = vmatprep.subr.bf16.mxu0 %v200
  %337 = vmatpush1.bf16.msra.mxu0 %v199
  %338 = vmatprep.subr.bf16.mxu0 %v206
  %339 = vmatpush1.bf16.msra.mxu0 %v205
  %340 = vmatprep.subr.bf16.mxu0 %v212
  %341 = vmatpush1.bf16.msra.mxu0 %v211
  %342 = vmatprep.subr.bf16.mxu0 %v218
  %343 = vmatpush1.bf16.msra.mxu0 %v217
  %344 = vmatprep.subr.bf16.mxu0 %v252
  %345 = vmatpush1.bf16.msra.mxu0 %v249
  %346 = vmatprep.subr.bf16.mxu0 0
  %347 = vmatpush1.bf16.msra.mxu0 0
  %348 = vmatprep.subr.bf16.mxu0 0
  %349 = vmatpush1.bf16.msra.mxu0 0
  %350 = vmatprep.subr.bf16.mxu0 0
  %351 = vmatpush1.bf16.msra.mxu0 0
  %352 = vmatprep.subr.bf16.mxu0 0
  %353 = vmatpush1.bf16.msra.mxu0 0
  %354 = vmatprep.subr.bf16.mxu0 0
  %355 = vmatpush1.bf16.msra.mxu0 0
  %356 = vmatprep.subr.bf16.mxu0 0
  %357 = vmatpush1.bf16.msra.mxu0 0
  %358 = vmatprep.subr.bf16.mxu0 0
  %359 = vmatpush1.bf16.msra.mxu0 0
  %360 = vmatprep.subr.bf16.mxu0 0
  %361 = vmatpush1.bf16.msra.mxu0 0
  %362 = vmatprep.subr.bf16.mxu0 0
  %363 = vmatpush1.bf16.msra.mxu0 0
  %364 = vmatprep.subr.bf16.mxu0 0
  %365 = vmatpush1.bf16.msra.mxu0 0
  %366 = vmatprep.subr.bf16.mxu0 0
  %367 = vmatpush1.bf16.msra.mxu0 0
  %368 = vmatprep.mubr.bf16.mxu0 0
  %369 = vmatmul.mubr.bf16.gmra.mrb[0].mxu0 %v233
  %v370 = vpop.f32.mrb[0].mxu0
  %v371 = vadd.f32 %v229, %v370
  %v372 = vpop.f32.mrb[0].mxu0
  %v373 = vadd.f32 %v229, %v372
  %v374 = vpop.f32.mrb[0].mxu0
  %v375 = vpop.f32.mrb[0].mxu0
  %376 = vdwg.mxu0
  %v377 = vmax.f32 %v289, 0.0
  %v378 = vmax.f32 %v291, 0.0
  %v379 = vmax.f32 %v330, 0.0
  %v380 = vmax.f32 %v332, 0.0
  %v381 = vmax.f32 %v371, 0.0
  %v382 = vmax.f32 %v373, 0.0
  %v384 = vlaneseq
  %v385 = vshrl.u32 %v384, 7
  %v386 = vsub.s32 0, %v385
  %v387 = vrot.slane %v33, %v386
  %v388 = vlaneseq
  %v389 = vshrl.u32 %v388, 7
  %v390 = vsub.s32 1, %v389
  %v391 = vrot.slane %v33, %v390
  %v392 = vlaneseq
  %v393 = vshrl.u32 %v392, 7
  %v394 = vsub.s32 2, %v393
  %v395 = vrot.slane %v33, %v394
  %v396 = vlaneseq
  %v397 = vshrl.u32 %v396, 7
  %v398 = vsub.s32 3, %v397
  %v399 = vrot.slane %v33, %v398
  %v400 = vlaneseq
  %v401 = vshrl.u32 %v400, 7
  %v402 = vsub.s32 4, %v401
  %v403 = vrot.slane %v33, %v402
  %v404 = vlaneseq
  %v405 = vshrl.u32 %v404, 7
  %v406 = vsub.s32 5, %v405
  %v407 = vrot.slane %v33, %v406
  %v414 = vmul.f32 %v377, %v387
  %v415 = vmul.f32 %v378, %v391
  %v416 = vmul.f32 %v379, %v395
  %v417 = vmul.f32 %v380, %v399
  %v418 = vmul.f32 %v381, %v403
  %v419 = vmul.f32 %v382, %v407
  %v420 = vld [vmem:[%s3] sm:$0xf]
  %421 = vrot.lane.b32.xlu0 %v414, 19
  %v422 = vpop.permute.xlu0 %421
  %423 = vrot.lane.b32.xlu0 %v415, 19
  %v424 = vpop.permute.xlu0 %423
  %425 = vrot.lane.b32.xlu0 %v416, 19
  %v426 = vpop.permute.xlu0 %425
  %427 = vrot.lane.b32.xlu0 %v417, 19
  %v428 = vpop.permute.xlu0 %427
  %429 = vrot.lane.b32.xlu0 %v418, 19
  %v430 = vpop.permute.xlu0 %429
  %431 = vrot.lane.b32.xlu0 %v419, 19
  %v432 = vpop.permute.xlu0 %431
  %v433 = vsel %vm55, %v430, %v432
  %v434 = vsel %vm55, %v428, %v430
  %v435 = vsel %vm55, %v426, %v428
  %v436 = vsel %vm55, %v424, %v426
  %v437 = vsel %vm55, %v422, %v424
  %v438 = vsel %vm55, %v432, %v422
  %439 = vrot.lane.b32.xlu0 %v414, 18
  %v440 = vpop.permute.xlu0 %439
  %441 = vrot.lane.b32.xlu0 %v415, 18
  %v442 = vpop.permute.xlu0 %441
  %443 = vrot.lane.b32.xlu0 %v416, 18
  %v444 = vpop.permute.xlu0 %443
  %445 = vrot.lane.b32.xlu0 %v417, 18
  %v446 = vpop.permute.xlu0 %445
  %447 = vrot.lane.b32.xlu0 %v418, 18
  %v448 = vpop.permute.xlu0 %447
  %449 = vrot.lane.b32.xlu0 %v419, 18
  %v450 = vpop.permute.xlu0 %449
  %v451 = vsel %vm74, %v448, %v450
  %v452 = vsel %vm74, %v446, %v448
  %v453 = vsel %vm74, %v444, %v446
  %v454 = vsel %vm74, %v442, %v444
  %v455 = vsel %vm74, %v440, %v442
  %v456 = vsel %vm74, %v450, %v440
  %457 = vrot.lane.b32.xlu0 %v414, 17
  %v458 = vpop.permute.xlu0 %457
  %459 = vrot.lane.b32.xlu0 %v415, 17
  %v460 = vpop.permute.xlu0 %459
  %461 = vrot.lane.b32.xlu0 %v416, 17
  %v462 = vpop.permute.xlu0 %461
  %463 = vrot.lane.b32.xlu0 %v417, 17
  %v464 = vpop.permute.xlu0 %463
  %465 = vrot.lane.b32.xlu0 %v418, 17
  %v466 = vpop.permute.xlu0 %465
  %467 = vrot.lane.b32.xlu0 %v419, 17
  %v468 = vpop.permute.xlu0 %467
  %v469 = vsel %vm93, %v466, %v468
  %v470 = vsel %vm93, %v464, %v466
  %v471 = vsel %vm93, %v462, %v464
  %v472 = vsel %vm93, %v460, %v462
  %v473 = vsel %vm93, %v458, %v460
  %v474 = vsel %vm93, %v468, %v458
  %475 = vrot.lane.b32.xlu0 %v414, 1
  %v476 = vpop.permute.xlu0 %475
  %477 = vrot.lane.b32.xlu0 %v415, 1
  %v478 = vpop.permute.xlu0 %477
  %479 = vrot.lane.b32.xlu0 %v416, 1
  %v480 = vpop.permute.xlu0 %479
  %481 = vrot.lane.b32.xlu0 %v417, 1
  %v482 = vpop.permute.xlu0 %481
  %483 = vrot.lane.b32.xlu0 %v418, 1
  %v484 = vpop.permute.xlu0 %483
  %485 = vrot.lane.b32.xlu0 %v419, 1
  %v486 = vpop.permute.xlu0 %485
  %v487 = vsel %vm112, %v484, %v486
  %v488 = vsel %vm112, %v482, %v484
  %v489 = vsel %vm112, %v480, %v482
  %v490 = vsel %vm112, %v478, %v480
  %v491 = vsel %vm112, %v476, %v478
  %v492 = vsel %vm112, %v486, %v476
  %493 = vrot.lane.b32.xlu0 %v414, 127
  %v494 = vpop.permute.xlu0 %493
  %495 = vrot.lane.b32.xlu0 %v415, 127
  %v496 = vpop.permute.xlu0 %495
  %497 = vrot.lane.b32.xlu0 %v416, 127
  %v498 = vpop.permute.xlu0 %497
  %499 = vrot.lane.b32.xlu0 %v417, 127
  %v500 = vpop.permute.xlu0 %499
  %501 = vrot.lane.b32.xlu0 %v418, 127
  %v502 = vpop.permute.xlu0 %501
  %503 = vrot.lane.b32.xlu0 %v419, 127
  %v504 = vpop.permute.xlu0 %503
  %v505 = vsel %vm131, %v502, %v504
  %v506 = vsel %vm131, %v500, %v502
  %v507 = vsel %vm131, %v498, %v500
  %v508 = vsel %vm131, %v496, %v498
  %v509 = vsel %vm131, %v494, %v496
  %v510 = vsel %vm131, %v504, %v494
  %511 = vrot.lane.b32.xlu0 %v414, 111
  %v512 = vpop.permute.xlu0 %511
  %513 = vrot.lane.b32.xlu0 %v415, 111
  %v514 = vpop.permute.xlu0 %513
  %515 = vrot.lane.b32.xlu0 %v416, 111
  %v516 = vpop.permute.xlu0 %515
  %517 = vrot.lane.b32.xlu0 %v417, 111
  %v518 = vpop.permute.xlu0 %517
  %519 = vrot.lane.b32.xlu0 %v418, 111
  %v520 = vpop.permute.xlu0 %519
  %521 = vrot.lane.b32.xlu0 %v419, 111
  %v522 = vpop.permute.xlu0 %521
  %v523 = vsel %vm150, %v520, %v522
  %v524 = vsel %vm150, %v518, %v520
  %v525 = vsel %vm150, %v516, %v518
  %v526 = vsel %vm150, %v514, %v516
  %v527 = vsel %vm150, %v512, %v514
  %v528 = vsel %vm150, %v522, %v512
  %529 = vrot.lane.b32.xlu0 %v414, 110
  %v530 = vpop.permute.xlu0 %529
  %531 = vrot.lane.b32.xlu0 %v415, 110
  %v532 = vpop.permute.xlu0 %531
  %533 = vrot.lane.b32.xlu0 %v416, 110
  %v534 = vpop.permute.xlu0 %533
  %535 = vrot.lane.b32.xlu0 %v417, 110
  %v536 = vpop.permute.xlu0 %535
  %537 = vrot.lane.b32.xlu0 %v418, 110
  %v538 = vpop.permute.xlu0 %537
  %539 = vrot.lane.b32.xlu0 %v419, 110
  %v540 = vpop.permute.xlu0 %539
  %v541 = vsel %vm169, %v538, %v540
  %v542 = vsel %vm169, %v536, %v538
  %v543 = vsel %vm169, %v534, %v536
  %v544 = vsel %vm169, %v532, %v534
  %v545 = vsel %vm169, %v530, %v532
  %v546 = vsel %vm169, %v540, %v530
  %547 = vrot.lane.b32.xlu0 %v414, 109
  %v548 = vpop.permute.xlu0 %547
  %549 = vrot.lane.b32.xlu0 %v415, 109
  %v550 = vpop.permute.xlu0 %549
  %551 = vrot.lane.b32.xlu0 %v416, 109
  %v552 = vpop.permute.xlu0 %551
  %553 = vrot.lane.b32.xlu0 %v417, 109
  %v554 = vpop.permute.xlu0 %553
  %555 = vrot.lane.b32.xlu0 %v418, 109
  %v556 = vpop.permute.xlu0 %555
  %557 = vrot.lane.b32.xlu0 %v419, 109
  %v558 = vpop.permute.xlu0 %557
  %v559 = vsel %vm188, %v556, %v558
  %v560 = vsel %vm188, %v554, %v556
  %v561 = vsel %vm188, %v552, %v554
  %v562 = vsel %vm188, %v550, %v552
  %v563 = vsel %vm188, %v548, %v550
  %v564 = vsel %vm188, %v558, %v548
  %v565 = vpack.c.bf16 %v456, %v438
  %v566 = vpack.c.bf16 %v455, %v437
  %v567 = vpack.c.bf16 %v454, %v436
  %v568 = vpack.c.bf16 %v453, %v435
  %v569 = vpack.c.bf16 %v452, %v434
  %v570 = vpack.c.bf16 %v451, %v433
  %v571 = vpack.c.bf16 %v492, %v474
  %v572 = vpack.c.bf16 %v491, %v473
  %v573 = vpack.c.bf16 %v490, %v472
  %v574 = vpack.c.bf16 %v489, %v471
  %v575 = vpack.c.bf16 %v488, %v470
  %v576 = vpack.c.bf16 %v487, %v469
  %v577 = vpack.c.bf16 %v509, %v414
  %v578 = vpack.c.bf16 %v508, %v415
  %v579 = vpack.c.bf16 %v507, %v416
  %v580 = vpack.c.bf16 %v506, %v417
  %v581 = vpack.c.bf16 %v505, %v418
  %v582 = vpack.c.bf16 %v510, %v419
  %v583 = vpack.c.bf16 %v545, %v527
  %v584 = vpack.c.bf16 %v544, %v526
  %v585 = vpack.c.bf16 %v543, %v525
  %v586 = vpack.c.bf16 %v542, %v524
  %v587 = vpack.c.bf16 %v541, %v523
  %v588 = vpack.c.bf16 %v546, %v528
  %v589 = vpack.c.bf16 %v563, %v563
  %v590 = vpack.c.bf16 %v562, %v562
  %v591 = vpack.c.bf16 %v561, %v561
  %v592 = vpack.c.bf16 %v560, %v560
  %v593 = vpack.c.bf16 %v559, %v559
  %v594 = vpack.c.bf16 %v564, %v564
  %v596 = vsel %vm231, %v420, 0
  %v599 = vsel %vm235, %v589, 0
  %v602 = vsel %vm235, %v590, 0
  %v605 = vsel %vm235, %v591, 0
  %v608 = vsel %vm235, %v592, 0
  %v611 = vsel %vm235, %v593, 0
  %v614 = vsel %vm235, %v594, 0
  %616 = vmatprep.subr.bf16.mxu0 %v566
  %617 = vmatpush1.bf16.msra.mxu0 %v565
  %618 = vmatprep.subr.bf16.mxu0 %v572
  %619 = vmatpush1.bf16.msra.mxu0 %v571
  %620 = vmatprep.subr.bf16.mxu0 %v578
  %621 = vmatpush1.bf16.msra.mxu0 %v577
  %622 = vmatprep.subr.bf16.mxu0 %v584
  %623 = vmatpush1.bf16.msra.mxu0 %v583
  %624 = vmatprep.subr.bf16.mxu0 %v602
  %625 = vmatpush1.bf16.msra.mxu0 %v599
  %626 = vmatprep.subr.bf16.mxu0 0
  %627 = vmatpush1.bf16.msra.mxu0 0
  %628 = vmatprep.subr.bf16.mxu0 0
  %629 = vmatpush1.bf16.msra.mxu0 0
  %630 = vmatprep.subr.bf16.mxu0 0
  %631 = vmatpush1.bf16.msra.mxu0 0
  %632 = vmatprep.subr.bf16.mxu0 0
  %633 = vmatpush1.bf16.msra.mxu0 0
  %634 = vmatprep.subr.bf16.mxu0 0
  %635 = vmatpush1.bf16.msra.mxu0 0
  %636 = vmatprep.subr.bf16.mxu0 0
  %637 = vmatpush1.bf16.msra.mxu0 0
  %638 = vmatprep.subr.bf16.mxu0 0
  %639 = vmatpush1.bf16.msra.mxu0 0
  %640 = vmatprep.subr.bf16.mxu0 0
  %641 = vmatpush1.bf16.msra.mxu0 0
  %642 = vmatprep.subr.bf16.mxu0 0
  %643 = vmatpush1.bf16.msra.mxu0 0
  %644 = vmatprep.subr.bf16.mxu0 0
  %645 = vmatpush1.bf16.msra.mxu0 0
  %646 = vmatprep.subr.bf16.mxu0 0
  %647 = vmatpush1.bf16.msra.mxu0 0
  %648 = vmatprep.mubr.bf16.mxu0 0
  %649 = vmatmul.mubr.bf16.gmra.mrb[0].mxu0 %v596
  %v650 = vpop.f32.mrb[0].mxu0
  %v651 = vadd.f32 0.0, %v650
  %v652 = vpop.f32.mrb[0].mxu0
  %v653 = vadd.f32 0.0, %v652
  %v654 = vpop.f32.mrb[0].mxu0
  %v655 = vpop.f32.mrb[0].mxu0
  %656 = vdwg.mxu0
  %657 = vmatprep.subr.bf16.mxu0 %v568
  %658 = vmatpush1.bf16.msra.mxu0 %v567
  %659 = vmatprep.subr.bf16.mxu0 %v574
  %660 = vmatpush1.bf16.msra.mxu0 %v573
  %661 = vmatprep.subr.bf16.mxu0 %v580
  %662 = vmatpush1.bf16.msra.mxu0 %v579
  %663 = vmatprep.subr.bf16.mxu0 %v586
  %664 = vmatpush1.bf16.msra.mxu0 %v585
  %665 = vmatprep.subr.bf16.mxu0 %v608
  %666 = vmatpush1.bf16.msra.mxu0 %v605
  %667 = vmatprep.subr.bf16.mxu0 0
  %668 = vmatpush1.bf16.msra.mxu0 0
  %669 = vmatprep.subr.bf16.mxu0 0
  %670 = vmatpush1.bf16.msra.mxu0 0
  %671 = vmatprep.subr.bf16.mxu0 0
  %672 = vmatpush1.bf16.msra.mxu0 0
  %673 = vmatprep.subr.bf16.mxu0 0
  %674 = vmatpush1.bf16.msra.mxu0 0
  %675 = vmatprep.subr.bf16.mxu0 0
  %676 = vmatpush1.bf16.msra.mxu0 0
  %677 = vmatprep.subr.bf16.mxu0 0
  %678 = vmatpush1.bf16.msra.mxu0 0
  %679 = vmatprep.subr.bf16.mxu0 0
  %680 = vmatpush1.bf16.msra.mxu0 0
  %681 = vmatprep.subr.bf16.mxu0 0
  %682 = vmatpush1.bf16.msra.mxu0 0
  %683 = vmatprep.subr.bf16.mxu0 0
  %684 = vmatpush1.bf16.msra.mxu0 0
  %685 = vmatprep.subr.bf16.mxu0 0
  %686 = vmatpush1.bf16.msra.mxu0 0
  %687 = vmatprep.subr.bf16.mxu0 0
  %688 = vmatpush1.bf16.msra.mxu0 0
  %689 = vmatprep.mubr.bf16.mxu0 0
  %690 = vmatmul.mubr.bf16.gmra.mrb[0].mxu0 %v596
  %v691 = vpop.f32.mrb[0].mxu0
  %v692 = vadd.f32 0.0, %v691
  %v693 = vpop.f32.mrb[0].mxu0
  %v694 = vadd.f32 0.0, %v693
  %v695 = vpop.f32.mrb[0].mxu0
  %v696 = vpop.f32.mrb[0].mxu0
  %697 = vdwg.mxu0
  %698 = vmatprep.subr.bf16.mxu0 %v570
  %699 = vmatpush1.bf16.msra.mxu0 %v569
  %700 = vmatprep.subr.bf16.mxu0 %v576
  %701 = vmatpush1.bf16.msra.mxu0 %v575
  %702 = vmatprep.subr.bf16.mxu0 %v582
  %703 = vmatpush1.bf16.msra.mxu0 %v581
  %704 = vmatprep.subr.bf16.mxu0 %v588
  %705 = vmatpush1.bf16.msra.mxu0 %v587
  %706 = vmatprep.subr.bf16.mxu0 %v614
  %707 = vmatpush1.bf16.msra.mxu0 %v611
  %708 = vmatprep.subr.bf16.mxu0 0
  %709 = vmatpush1.bf16.msra.mxu0 0
  %710 = vmatprep.subr.bf16.mxu0 0
  %711 = vmatpush1.bf16.msra.mxu0 0
  %712 = vmatprep.subr.bf16.mxu0 0
  %713 = vmatpush1.bf16.msra.mxu0 0
  %714 = vmatprep.subr.bf16.mxu0 0
  %715 = vmatpush1.bf16.msra.mxu0 0
  %716 = vmatprep.subr.bf16.mxu0 0
  %717 = vmatpush1.bf16.msra.mxu0 0
  %718 = vmatprep.subr.bf16.mxu0 0
  %719 = vmatpush1.bf16.msra.mxu0 0
  %720 = vmatprep.subr.bf16.mxu0 0
  %721 = vmatpush1.bf16.msra.mxu0 0
  %722 = vmatprep.subr.bf16.mxu0 0
  %723 = vmatpush1.bf16.msra.mxu0 0
  %724 = vmatprep.subr.bf16.mxu0 0
  %725 = vmatpush1.bf16.msra.mxu0 0
  %726 = vmatprep.subr.bf16.mxu0 0
  %727 = vmatpush1.bf16.msra.mxu0 0
  %728 = vmatprep.subr.bf16.mxu0 0
  %729 = vmatpush1.bf16.msra.mxu0 0
  %730 = vmatprep.mubr.bf16.mxu0 0
  %731 = vmatmul.mubr.bf16.gmra.mrb[0].mxu0 %v596
  %v732 = vpop.f32.mrb[0].mxu0
  %v733 = vadd.f32 0.0, %v732
  %v734 = vpop.f32.mrb[0].mxu0
  %v735 = vadd.f32 0.0, %v734
  %v736 = vpop.f32.mrb[0].mxu0
  %v737 = vpop.f32.mrb[0].mxu0
  %738 = vdwg.mxu0
  %v739 = vadd.f32 %v27, %v651
  %v740 = vadd.f32 %v28, %v653
  %v741 = vadd.f32 %v29, %v692
  %v742 = vadd.f32 %v30, %v694
  %v743 = vadd.f32 %v31, %v733
  %v744 = vadd.f32 %v32, %v735
  %v745 = vld [vmem:[%s4] sm:$0xff]
  %747 = vset.pattern.permute.xlu0 0
  %748 = vperm.xlu0 %747, %v745
  %v749 = vpop.permute.xlu0 %748
  %v751 = vadd.f32 %v739, %v749
  %v752 = vadd.f32 %v740, %v749
  %v753 = vadd.f32 %v741, %v749
  %v754 = vadd.f32 %v742, %v749
  %v755 = vadd.f32 %v743, %v749
  %v756 = vadd.f32 %v744, %v749
  %v757 = vmul.f32 %v751, %v387
  %v758 = vmul.f32 %v752, %v391
  %v759 = vmul.f32 %v753, %v395
  %v760 = vmul.f32 %v754, %v399
  %v761 = vmul.f32 %v755, %v403
  %v762 = vmul.f32 %v756, %v407
  %v763 = vpack.c.bf16 %v757, %v757
  %v764 = vpack.c.bf16 %v758, %v758
  %v765 = vpack.c.bf16 %v759, %v759
  %v766 = vpack.c.bf16 %v760, %v760
  %v767 = vpack.c.bf16 %v761, %v761
  %v768 = vpack.c.bf16 %v762, %v762
  %v775 = vunpack.c.l.b16 %v763
  %v776 = vunpack.c.l.b16 %v764
  %v777 = vunpack.c.l.b16 %v765
  %v778 = vunpack.c.l.b16 %v766
  %v779 = vunpack.c.l.b16 %v767
  %v780 = vunpack.c.l.b16 %v768
  %v781 = vpack.c.b16 %v776, %v775
  %v782 = vpack.c.b16 %v778, %v777
  %v783 = vpack.c.b16 %v780, %v779
  %787 = vst [vmem:[%s6] sm:$0xff] %v781
  %788 = vst [vmem:[%s6 + $0x8] sm:$0xff] %v782
  %789 = vst [vmem:[%s6 + $0x10] sm:$0xff] %v783
  // Predicated region
  $region26: #{resblock_forward.1} parent=0 // pred_check
    _
  $region27: #{resblock_forward.1} parent=0 // pred_check_branch
    %791 = sbr.rel (0) target = $region29
  $region28: #{resblock_forward.1} parent=0 // pred_region
    _
  $region29: #{resblock_forward.1} parent=0 // pred_fallthru
    _
  // Predicated region
  $region30: #{resblock_forward.1} parent=0 // pred_check
    _
  $region31: #{resblock_forward.1} parent=0 // pred_check_branch
    %793 = sbr.rel (0) target = $region33
  $region32: #{resblock_forward.1} parent=0 // pred_region
    _
  $region33: #{resblock_forward.1} parent=0 // pred_fallthru
    _

</llo_original>
